<compile_context>
chip_gen: v6e
topology: v6e:2x2x1
jax: 0.10.0
libtpu: 0.0.40
codegen_flags: <defaults>
</compile_context>

<pallas_src>
import functools

import jax
import jax.numpy as jnp
from jax.experimental import pallas as pl
from jax.experimental.pallas import tpu as pltpu

HIDDEN = 64
FUSED_H = 2 * HIDDEN      # 128 fused hidden lanes: [actor | critic]
OUT_LANES = 128           # lane-dense output slab width


def _round_up(n, m):
    return (n + m - 1) // m * m


def _policy_kernel(x_ref, w1_ref, b1_ref, w2_ref, b2_ref, w3_ref, b3_ref,
                   out_ref):
    x = x_ref[...]
    h = jnp.tanh(jnp.dot(x, w1_ref[...], preferred_element_type=jnp.float32)
                 + b1_ref[...])
    h = jnp.tanh(jnp.dot(h, w2_ref[...], preferred_element_type=jnp.float32)
                 + b2_ref[...])
    out_ref[...] = (jnp.dot(h, w3_ref[...], preferred_element_type=jnp.float32)
                    + b3_ref[...])


def pack_params(params):
    """Fuse actor/critic parameters into 3 lane-dense (..., 128) matmuls."""
    f32 = jnp.float32
    H = params["w1a"].shape[1]
    A = params["w3a"].shape[1]
    assert 2 * H == FUSED_H and A + 1 <= OUT_LANES

    w1 = jnp.concatenate([params["w1a"], params["w1c"]], axis=1).astype(f32)
    b1 = jnp.concatenate([params["b1a"], params["b1c"]], axis=1).astype(f32)

    w2 = jnp.zeros((2 * H, 2 * H), f32)
    w2 = w2.at[:H, :H].set(params["w2a"]).at[H:, H:].set(params["w2c"])
    b2 = jnp.concatenate([params["b2a"], params["b2c"]], axis=1).astype(f32)

    w3 = jnp.zeros((2 * H, OUT_LANES), f32)
    w3 = w3.at[:H, :A].set(params["w3a"]).at[H:, A:A + 1].set(params["w3c"])
    b3 = jnp.zeros((1, OUT_LANES), f32)
    b3 = b3.at[:, :A].set(params["b3a"]).at[:, A:A + 1].set(params["b3c"])

    # TODO(synk): optionally cast packed weights to bf16 for native-bf16 MXUs
    # (v5e/v6e/v7x); kept f32 here for bit-tight parity with the torch module.
    return {"w1": w1, "b1": b1, "w2": w2, "b2": b2, "w3": w3, "b3": b3,
            "sigma": params["sigma"].astype(f32)}


@functools.partial(jax.jit, static_argnames=("action_space",))
def policy_forward(x, packed, *, action_space):
    """Returns (action_mean, sigma, value) — the parameters behind
    (Normal(action_mean, sigma), value) of the torch Policy.forward."""
    B, S = x.shape
    A = action_space

    # Batch tile: multiple of 8 sublanes, capped at 512 rows (double-buffered
    # x + output tiles stay far below the v7x 32 MiB scoped-VMEM default).
    b8 = _round_up(B, 8)
    tb = min(512, b8)
    b_pad = _round_up(B, tb)

    x = x.astype(jnp.float32)
    if b_pad != B:
        x = jnp.concatenate(
            [x, jnp.zeros((b_pad - B, S), jnp.float32)], axis=0)

    resident = lambda shape: pl.BlockSpec(shape, lambda i: (0, 0))

    out = pl.pallas_call(
        _policy_kernel,
        out_shape=jax.ShapeDtypeStruct((b_pad, OUT_LANES), jnp.float32),
        grid=(b_pad // tb,),
        in_specs=[
            pl.BlockSpec((tb, S), lambda i: (i, 0)),        # x (batch-tiled)
            resident(packed["w1"].shape),
            resident(packed["b1"].shape),
            resident(packed["w2"].shape),
            resident(packed["b2"].shape),
            resident(packed["w3"].shape),
            resident(packed["b3"].shape),
        ],
        out_specs=pl.BlockSpec((tb, OUT_LANES), lambda i: (i, 0)),
        compiler_params=pltpu.CompilerParams(
            dimension_semantics=("parallel",)),
    )(x, packed["w1"], packed["b1"], packed["w2"], packed["b2"],
      packed["w3"], packed["b3"])

    mean = out[:B, :A]
    value = out[:B, A:A + 1]
    # sigma does not depend on x: computed once outside the kernel.
    sigma = jax.nn.softplus(packed["sigma"])[0]
    return mean, sigma, value


def init_params(key, state_space, action_space, hidden=HIDDEN):
    """Matches Policy.init_weights: weights ~ N(0,1), biases = 0, sigma = 0.5.
    Weights are stored transposed relative to torch ((in, out))."""
    ks = jax.random.split(key, 6)
    return {
        "w1a": jax.random.normal(ks[0], (state_space, hidden), jnp.float32),
        "b1a": jnp.zeros((1, hidden), jnp.float32),
        "w2a": jax.random.normal(ks[1], (hidden, hidden), jnp.float32),
        "b2a": jnp.zeros((1, hidden), jnp.float32),
        "w3a": jax.random.normal(ks[2], (hidden, action_space), jnp.float32),
        "b3a": jnp.zeros((1, action_space), jnp.float32),
        "sigma": jnp.full((1, action_space), 0.5, jnp.float32),
        "w1c": jax.random.normal(ks[3], (state_space, hidden), jnp.float32),
        "b1c": jnp.zeros((1, hidden), jnp.float32),
        "w2c": jax.random.normal(ks[4], (hidden, hidden), jnp.float32),
        "b2c": jnp.zeros((1, hidden), jnp.float32),
        "w3c": jax.random.normal(ks[5], (hidden, 1), jnp.float32),
        "b3c": jnp.zeros((1, 1), jnp.float32),
    }


def _reference_forward(x, p):
    """Plain-JAX reference of the torch forward."""
    h = jnp.tanh(x @ p["w1a"] + p["b1a"])
    h = jnp.tanh(h @ p["w2a"] + p["b2a"])
    mean = h @ p["w3a"] + p["b3a"]
    sigma = jax.nn.softplus(p["sigma"])[0]
    c = jnp.tanh(x @ p["w1c"] + p["b1c"])
    c = jnp.tanh(c @ p["w2c"] + p["b2c"])
    value = c @ p["w3c"] + p["b3c"]
    return mean, sigma, value


def _check(x, params, packed, action_space):
    mean, sigma, value = jax.block_until_ready(
        policy_forward(x, packed, action_space=action_space))
    mean_r, sigma_r, value_r = _reference_forward(x, params)
    assert mean.shape == mean_r.shape and value.shape == value_r.shape
    assert jnp.allclose(mean, mean_r, atol=1e-4, rtol=1e-4)
    assert jnp.allclose(sigma, sigma_r, atol=1e-5, rtol=1e-5)
    assert jnp.allclose(value, value_r, atol=1e-4, rtol=1e-4)


if __name__ == "__main__":
    state_space = 8
    action_space = 4

    key = jax.random.PRNGKey(0)
    k_params, k_x1, k_x2 = jax.random.split(key, 3)
    params = init_params(k_params, state_space, action_space)
    packed = pack_params(params)

    # Small deterministic batch (B=2): single grid step, padded to 8 rows.
    x_small = jax.random.normal(k_x1, (2, state_space), jnp.float32)
    _check(x_small, params, packed, action_space)

    # Larger batch to exercise batch tiling (grid > 1) + padding path.
    x_big = jax.random.normal(k_x2, (1030, state_space), jnp.float32)
    _check(x_big, params, packed, action_space)

    # The torch module returns (Normal(action_mean, sigma), value); here we
    # return the distribution parameters (mean, sigma) plus value.
    print("KERNEL_OK")
</pallas_src>

<mosaic_0001>
module attributes {stable_mosaic.version = 11 : i64} {
  func.func @_policy_kernel(%arg0: i32, %arg1: memref<8x8xf32, #tpu.memory_space<vmem>>, %arg2: memref<8x128xf32, #tpu.memory_space<vmem>>, %arg3: memref<1x128xf32, #tpu.memory_space<vmem>>, %arg4: memref<128x128xf32, #tpu.memory_space<vmem>>, %arg5: memref<1x128xf32, #tpu.memory_space<vmem>>, %arg6: memref<128x128xf32, #tpu.memory_space<vmem>>, %arg7: memref<1x128xf32, #tpu.memory_space<vmem>>, %arg8: memref<8x128xf32, #tpu.memory_space<vmem>>) attributes {dimension_semantics = [#tpu.dimension_semantics<parallel>], iteration_bounds = array<i64: 1>, scalar_prefetch = 0 : i64, scratch_operands = 0 : i64, tpu.core_type = #tpu.core_type<tc>, window_params = [{transform_indices = @transform_0, window_bounds = array<i64: 8, 8>}, {pipeline_mode = #tpu.pipeline_mode<synchronous>, transform_indices = @transform_1, window_bounds = array<i64: 8, 128>}, {pipeline_mode = #tpu.pipeline_mode<synchronous>, transform_indices = @transform_2, window_bounds = array<i64: 1, 128>}, {pipeline_mode = #tpu.pipeline_mode<synchronous>, transform_indices = @transform_3, window_bounds = array<i64: 128, 128>}, {pipeline_mode = #tpu.pipeline_mode<synchronous>, transform_indices = @transform_4, window_bounds = array<i64: 1, 128>}, {pipeline_mode = #tpu.pipeline_mode<synchronous>, transform_indices = @transform_5, window_bounds = array<i64: 128, 128>}, {pipeline_mode = #tpu.pipeline_mode<synchronous>, transform_indices = @transform_6, window_bounds = array<i64: 1, 128>}, {transform_indices = @transform_7, window_bounds = array<i64: 8, 128>}]} {
    %c0 = arith.constant 0 : index
    %c0_0 = arith.constant 0 : index
    %0 = vector.load %arg1[%c0, %c0_0] : memref<8x8xf32, #tpu.memory_space<vmem>>, vector<8x8xf32>
    %c0_1 = arith.constant 0 : index
    %c0_2 = arith.constant 0 : index
    %1 = vector.load %arg2[%c0_1, %c0_2] : memref<8x128xf32, #tpu.memory_space<vmem>>, vector<8x128xf32>
    %cst = arith.constant dense<0.000000e+00> : vector<8x128xf32>
    %2 = tpu.matmul %0, %1, %cst {dimension_numbers = #tpu.dot_dimension_numbers<[1], [0], [0], [1], [0, 0, 1, 1], [], []>} : vector<8x8xf32>, vector<8x128xf32>, vector<8x128xf32> -> vector<8x128xf32>
    %c0_3 = arith.constant 0 : index
    %c0_4 = arith.constant 0 : index
    %3 = vector.load %arg3[%c0_3, %c0_4] : memref<1x128xf32, #tpu.memory_space<vmem>>, vector<1x128xf32>
    %4 = vector.broadcast %3 : vector<1x128xf32> to vector<8x128xf32>
    %5 = arith.addf %2, %4 : vector<8x128xf32>
    %6 = math.tanh %5 : vector<8x128xf32>
    %c0_5 = arith.constant 0 : index
    %c0_6 = arith.constant 0 : index
    %7 = vector.load %arg4[%c0_5, %c0_6] : memref<128x128xf32, #tpu.memory_space<vmem>>, vector<128x128xf32>
    %cst_7 = arith.constant dense<0.000000e+00> : vector<8x128xf32>
    %8 = tpu.matmul %6, %7, %cst_7 {dimension_numbers = #tpu.dot_dimension_numbers<[1], [0], [0], [1], [0, 0, 1, 1], [], []>} : vector<8x128xf32>, vector<128x128xf32>, vector<8x128xf32> -> vector<8x128xf32>
    %c0_8 = arith.constant 0 : index
    %c0_9 = arith.constant 0 : index
    %9 = vector.load %arg5[%c0_8, %c0_9] : memref<1x128xf32, #tpu.memory_space<vmem>>, vector<1x128xf32>
    %10 = vector.broadcast %9 : vector<1x128xf32> to vector<8x128xf32>
    %11 = arith.addf %8, %10 : vector<8x128xf32>
    %12 = math.tanh %11 : vector<8x128xf32>
    %c0_10 = arith.constant 0 : index
    %c0_11 = arith.constant 0 : index
    %13 = vector.load %arg6[%c0_10, %c0_11] : memref<128x128xf32, #tpu.memory_space<vmem>>, vector<128x128xf32>
    %cst_12 = arith.constant dense<0.000000e+00> : vector<8x128xf32>
    %14 = tpu.matmul %12, %13, %cst_12 {dimension_numbers = #tpu.dot_dimension_numbers<[1], [0], [0], [1], [0, 0, 1, 1], [], []>} : vector<8x128xf32>, vector<128x128xf32>, vector<8x128xf32> -> vector<8x128xf32>
    %c0_13 = arith.constant 0 : index
    %c0_14 = arith.constant 0 : index
    %15 = vector.load %arg7[%c0_13, %c0_14] : memref<1x128xf32, #tpu.memory_space<vmem>>, vector<1x128xf32>
    %16 = vector.broadcast %15 : vector<1x128xf32> to vector<8x128xf32>
    %17 = arith.addf %14, %16 : vector<8x128xf32>
    %c0_15 = arith.constant 0 : index
    %c0_16 = arith.constant 0 : index
    %18 = vector.load %arg8[%c0_15, %c0_16] : memref<8x128xf32, #tpu.memory_space<vmem>>, vector<8x128xf32>
    tpu.vector_store %arg8[%c0_15, %c0_16], %17 {strides = array<i32>} : memref<8x128xf32, #tpu.memory_space<vmem>>, vector<8x128xf32>,
    return
  }
  func.func @transform_0(%arg0: i32) -> (i32, i32) {
    %c0_i32 = arith.constant 0 : i32
    %c0_i32_0 = arith.constant 0 : i32
    return %arg0, %c0_i32 : i32, i32
  }
  func.func @transform_1(%arg0: i32) -> (i32, i32) {
    %c0_i32 = arith.constant 0 : i32
    %c0_i32_0 = arith.constant 0 : i32
    %c0_i32_1 = arith.constant 0 : i32
    return %c0_i32, %c0_i32_0 : i32, i32
  }
  func.func @transform_2(%arg0: i32) -> (i32, i32) {
    %c0_i32 = arith.constant 0 : i32
    %c0_i32_0 = arith.constant 0 : i32
    %c0_i32_1 = arith.constant 0 : i32
    return %c0_i32, %c0_i32_0 : i32, i32
  }
  func.func @transform_3(%arg0: i32) -> (i32, i32) {
    %c0_i32 = arith.constant 0 : i32
    %c0_i32_0 = arith.constant 0 : i32
    %c0_i32_1 = arith.constant 0 : i32
    return %c0_i32, %c0_i32_0 : i32, i32
  }
  func.func @transform_4(%arg0: i32) -> (i32, i32) {
    %c0_i32 = arith.constant 0 : i32
    %c0_i32_0 = arith.constant 0 : i32
    %c0_i32_1 = arith.constant 0 : i32
    return %c0_i32, %c0_i32_0 : i32, i32
  }
  func.func @transform_5(%arg0: i32) -> (i32, i32) {
    %c0_i32 = arith.constant 0 : i32
    %c0_i32_0 = arith.constant 0 : i32
    %c0_i32_1 = arith.constant 0 : i32
    return %c0_i32, %c0_i32_0 : i32, i32
  }
  func.func @transform_6(%arg0: i32) -> (i32, i32) {
    %c0_i32 = arith.constant 0 : i32
    %c0_i32_0 = arith.constant 0 : i32
    %c0_i32_1 = arith.constant 0 : i32
    return %c0_i32, %c0_i32_0 : i32, i32
  }
  func.func @transform_7(%arg0: i32) -> (i32, i32) {
    %c0_i32 = arith.constant 0 : i32
    %c0_i32_0 = arith.constant 0 : i32
    return %arg0, %c0_i32 : i32, i32
  }
}

</mosaic_0001>

<llo_original>
// kernel: policy_forward.1
$region0: #{policy_forward.1}
  #allocation0 [shape = 'u32[]', space=smem, size = 0x4, offset = 0x4, fixed_abs, tag = 'smem constant byte address 0x4 - core index']
  #allocation1 [shape = 'u32[144,128]{1,0:T(1,128)}', space=vmem, size = 0x12000, scoped, tag = 'internal scratch']
  %s0 = inlined_call_operand.vmem [shape: f32[8,8], index: 0, kind: input, shape index: {}]
  %s1 = inlined_call_operand.vmem [shape: f32[8,128], index: 1, kind: input, shape index: {}]
  %s2 = inlined_call_operand.vmem [shape: f32[1,128], index: 2, kind: input, shape index: {}]
  %s3 = inlined_call_operand.hbm [shape: f32[128,128], index: 3, kind: input, shape index: {}]
  %s4 = inlined_call_operand.vmem [shape: f32[1,128], index: 4, kind: input, shape index: {}]
  %s5 = inlined_call_operand.hbm [shape: f32[128,128], index: 5, kind: input, shape index: {}]
  %s6 = inlined_call_operand.vmem [shape: f32[1,128], index: 6, kind: input, shape index: {}]
  %s7 = inlined_call_operand.vmem [shape: f32[8,128], index: 7, kind: output, shape index: {}]
  %s8 = sld [smem:[#allocation0]]
  $region46: #{policy_forward.1} parent=0
    _
  %s10 = ssub.s32 1, %s8
  %s11 = scalar_select 0, %s10, %s8
  $region1: #{policy_forward.1} parent=0
    #allocation2 [shape = 'u8[65536]{0}', space=vmem, size = 0x10000, scoped, tag = 'input window, operand 3, single buffered']
    #allocation3 [shape = 's32[1]{0}', space=sflag, size = 0x4, scoped, tag = 'scoped memory for policy_forward.1']
    #allocation4 [shape = 'u8[65536]{0}', space=vmem, size = 0x10000, scoped, tag = 'input window, operand 5, single buffered']
    #allocation5 [shape = 's32[1]{0}', space=sflag, size = 0x4, scoped, tag = 'scoped memory for policy_forward.1']
    %12 = vsyncpa [#allocation3], 0
    %13 = vsyncpa [#allocation5], 0
    // Predicated region
    $region2: #{policy_forward.1} parent=1 // pred_check
      _
    $region3: #{policy_forward.1} parent=1 // pred_check_branch
      %15 = sbr.rel (0) target = $region5
    $region4: #{policy_forward.1} parent=1 // pred_region
      _
    $region5: #{policy_forward.1} parent=1 // pred_fallthru
      _
    // Predicated region
    $region6: #{policy_forward.1} parent=1 // pred_check
      _
    $region7: #{policy_forward.1} parent=1 // pred_check_branch
      %17 = sbr.rel (0) target = $region9
    $region8: #{policy_forward.1} parent=1 // pred_region
      _
    $region9: #{policy_forward.1} parent=1 // pred_fallthru
      _
    // Predicated region
    $region10: #{policy_forward.1} parent=1 // pred_check
      _
    $region11: #{policy_forward.1} parent=1 // pred_check_branch
      %19 = sbr.rel (0) target = $region13
    $region12: #{policy_forward.1} parent=1 // pred_region
      _
    $region13: #{policy_forward.1} parent=1 // pred_fallthru
      _
    // Predicated region
    $region14: #{policy_forward.1} parent=1 // pred_check
      _
    $region15: #{policy_forward.1} parent=1 // pred_check_branch
      %21 = sbr.rel (0) target = $region17
    $region16: #{policy_forward.1} parent=1 // pred_region
      %s23 = ssub.s32 2048, 2048
      %24 = vsyncadd [#allocation3], %s23
      %s25 = sshll.u32 [#allocation2], 4
      %s26 = int_to_ptr.vmem [resolvable:$true] %s25
      %31 = dma.hbm_to_vmem [thread:$0]  %s3, 2048, %s26, [#allocation3], 128, 128, 8
    $region17: #{policy_forward.1} parent=1 // pred_fallthru
      _
    // Predicated region
    $region18: #{policy_forward.1} parent=1 // pred_check
      _
    $region19: #{policy_forward.1} parent=1 // pred_check_branch
      %33 = sbr.rel (0) target = $region21
    $region20: #{policy_forward.1} parent=1 // pred_region
      _
    $region21: #{policy_forward.1} parent=1 // pred_fallthru
      _
    // Predicated region
    $region22: #{policy_forward.1} parent=1 // pred_check
      _
    $region23: #{policy_forward.1} parent=1 // pred_check_branch
      %35 = sbr.rel (0) target = $region25
    $region24: #{policy_forward.1} parent=1 // pred_region
      %s37 = ssub.s32 2048, 2048
      %38 = vsyncadd [#allocation5], %s37
      %s39 = sshll.u32 [#allocation4], 4
      %s40 = int_to_ptr.vmem [resolvable:$true] %s39
      %45 = dma.hbm_to_vmem [thread:$0]  %s5, 2048, %s40, [#allocation5], 128, 128, 8
    $region25: #{policy_forward.1} parent=1 // pred_fallthru
      _
    // Predicated region
    $region26: #{policy_forward.1} parent=1 // pred_check
      _
    $region27: #{policy_forward.1} parent=1 // pred_check_branch
      %47 = sbr.rel (0) target = $region29
    $region28: #{policy_forward.1} parent=1 // pred_region
      _
    $region29: #{policy_forward.1} parent=1 // pred_fallthru
      _
    // Predicated region
    $region30: #{policy_forward.1} parent=1 // pred_check
      _
    $region31: #{policy_forward.1} parent=1 // pred_check_branch
      %49 = sbr.rel (0) target = $region33
    $region32: #{policy_forward.1} parent=1 // pred_region
      %50 = dma.done [#allocation3], 2048
    $region33: #{policy_forward.1} parent=1 // pred_fallthru
      _
    // Predicated region
    $region34: #{policy_forward.1} parent=1 // pred_check
      _
    $region35: #{policy_forward.1} parent=1 // pred_check_branch
      %52 = sbr.rel (0) target = $region37
    $region36: #{policy_forward.1} parent=1 // pred_region
      %53 = dma.done [#allocation5], 2048
    $region37: #{policy_forward.1} parent=1 // pred_fallthru
      _
    %v54 = vld [vmem:[%s0] sm:$0xff]
    %v55 = vld [vmem:[%s1] sm:$0xff]
    %v56 = vld [vmem:[%s2] sm:$0x1]
    %v58 = vlaneseq
    %v59 = vshrl.u32 %v58, 7
    %v60 = vsub.s32 0, %v59
    %v61 = vrot.slane %v56, %v60
    %vm63 = vcmask 64512
    %v65 = vsel %vm63, %v54, 0
    %67 = vmatprep.subr.mxu0 0.0
    %68 = vmatpush1.msra.mxu0 0.0
    %69 = vmatprep.subr.mxu0 0.0
    %70 = vmatpush1.msra.mxu0 0.0
    %71 = vmatprep.subr.mxu0 0.0
    %72 = vmatpush1.msra.mxu0 0.0
    %73 = vmatprep.subr.mxu0 0.0
    %74 = vmatpush1.msra.mxu0 0.0
    %75 = vmatprep.subr.mxu0 0.0
    %76 = vmatpush1.msra.mxu0 0.0
    %77 = vmatprep.subr.mxu0 0.0
    %78 = vmatpush1.msra.mxu0 0.0
    %79 = vmatprep.subr.mxu0 0.0
    %80 = vmatpush1.msra.mxu0 0.0
    %81 = vmatprep.subr.mxu0 0.0
    %82 = vmatpush1.msra.mxu0 0.0
    %83 = vmatprep.subr.mxu0 0.0
    %84 = vmatpush1.msra.mxu0 0.0
    %85 = vmatprep.subr.mxu0 0.0
    %86 = vmatpush1.msra.mxu0 0.0
    %87 = vmatprep.subr.mxu0 0.0
    %88 = vmatpush1.msra.mxu0 0.0
    %89 = vmatprep.subr.mxu0 0.0
    %90 = vmatpush1.msra.mxu0 0.0
    %91 = vmatprep.subr.mxu0 0.0
    %92 = vmatpush1.msra.mxu0 0.0
    %93 = vmatprep.subr.mxu0 0.0
    %94 = vmatpush1.msra.mxu0 0.0
    %95 = vmatprep.subr.mxu0 0.0
    %96 = vmatpush1.msra.mxu0 0.0
    %97 = vmatprep.subr.mxu0 0.0
    %98 = vmatpush1.msra.mxu0 %v55
    %99 = vmatprep.subr.mxu0 0.0
    %100 = vmatpush2.msra.mxu0 0.0
    %101 = vmatprep.subr.mxu0 0.0
    %102 = vmatpush2.msra.mxu0 0.0
    %103 = vmatprep.subr.mxu0 0.0
    %104 = vmatpush2.msra.mxu0 0.0
    %105 = vmatprep.subr.mxu0 0.0
    %106 = vmatpush2.msra.mxu0 0.0
    %107 = vmatprep.subr.mxu0 0.0
    %108 = vmatpush2.msra.mxu0 0.0
    %109 = vmatprep.subr.mxu0 0.0
    %110 = vmatpush2.msra.mxu0 0.0
    %111 = vmatprep.subr.mxu0 0.0
    %112 = vmatpush2.msra.mxu0 0.0
    %113 = vmatprep.subr.mxu0 0.0
    %114 = vmatpush2.msra.mxu0 0.0
    %115 = vmatprep.subr.mxu0 0.0
    %116 = vmatpush2.msra.mxu0 0.0
    %117 = vmatprep.subr.mxu0 0.0
    %118 = vmatpush2.msra.mxu0 0.0
    %119 = vmatprep.subr.mxu0 0.0
    %120 = vmatpush2.msra.mxu0 0.0
    %121 = vmatprep.subr.mxu0 0.0
    %122 = vmatpush2.msra.mxu0 0.0
    %123 = vmatprep.subr.mxu0 0.0
    %124 = vmatpush2.msra.mxu0 0.0
    %125 = vmatprep.subr.mxu0 0.0
    %126 = vmatpush2.msra.mxu0 0.0
    %127 = vmatprep.subr.mxu0 0.0
    %128 = vmatpush2.msra.mxu0 0.0
    %129 = vmatprep.subr.mxu0 0.0
    %130 = vmatpush2.msra.mxu0 0.0
    %131 = vmatprep.mubr.f32.mxu0 0.0
    %132 = vmatmul.mubr.f32.gmra.mxu0 %v65
    %v133 = vpop.f32.mrf.mxu0
    %v134 = vadd.f32 %v61, %v133
    %v135 = vpop.f32.mrf.mxu0
    %136 = vdwg.mxu0
    %v137 = vtanh.pop %v134
    %v138 = vld [vmem:[#allocation2] sm:$0xff]
    %v139 = vld [vmem:[#allocation2 + $0x8] sm:$0xff]
    %v140 = vld [vmem:[#allocation2 + $0x10] sm:$0xff]
    %v141 = vld [vmem:[#allocation2 + $0x18] sm:$0xff]
    %v142 = vld [vmem:[#allocation2 + $0x20] sm:$0xff]
    %v143 = vld [vmem:[#allocation2 + $0x28] sm:$0xff]
    %v144 = vld [vmem:[#allocation2 + $0x30] sm:$0xff]
    %v145 = vld [vmem:[#allocation2 + $0x38] sm:$0xff]
    %v146 = vld [vmem:[#allocation2 + $0x40] sm:$0xff]
    %v147 = vld [vmem:[#allocation2 + $0x48] sm:$0xff]
    %v148 = vld [vmem:[#allocation2 + $0x50] sm:$0xff]
    %v149 = vld [vmem:[#allocation2 + $0x58] sm:$0xff]
    %v150 = vld [vmem:[#allocation2 + $0x60] sm:$0xff]
    %v151 = vld [vmem:[#allocation2 + $0x68] sm:$0xff]
    %v152 = vld [vmem:[#allocation2 + $0x70] sm:$0xff]
    %v153 = vld [vmem:[#allocation2 + $0x78] sm:$0xff]
    %v154 = vld [vmem:[%s4] sm:$0x1]
    %v156 = vlaneseq
    %v157 = vshrl.u32 %v156, 7
    %v158 = vsub.s32 0, %v157
    %v159 = vrot.slane %v154, %v158
    %161 = vmatprep.subr.mxu0 0.0
    %162 = vmatpush1.msra.mxu0 %v153
    %163 = vmatprep.subr.mxu0 0.0
    %164 = vmatpush1.msra.mxu0 %v152
    %165 = vmatprep.subr.mxu0 0.0
    %166 = vmatpush1.msra.mxu0 %v151
    %167 = vmatprep.subr.mxu0 0.0
    %168 = vmatpush1.msra.mxu0 %v150
    %169 = vmatprep.subr.mxu0 0.0
    %170 = vmatpush1.msra.mxu0 %v149
    %171 = vmatprep.subr.mxu0 0.0
    %172 = vmatpush1.msra.mxu0 %v148
    %173 = vmatprep.subr.mxu0 0.0
    %174 = vmatpush1.msra.mxu0 %v147
    %175 = vmatprep.subr.mxu0 0.0
    %176 = vmatpush1.msra.mxu0 %v146
    %177 = vmatprep.subr.mxu0 0.0
    %178 = vmatpush1.msra.mxu0 %v145
    %179 = vmatprep.subr.mxu0 0.0
    %180 = vmatpush1.msra.mxu0 %v144
    %181 = vmatprep.subr.mxu0 0.0
    %182 = vmatpush1.msra.mxu0 %v143
    %183 = vmatprep.subr.mxu0 0.0
    %184 = vmatpush1.msra.mxu0 %v142
    %185 = vmatprep.subr.mxu0 0.0
    %186 = vmatpush1.msra.mxu0 %v141
    %187 = vmatprep.subr.mxu0 0.0
    %188 = vmatpush1.msra.mxu0 %v140
    %189 = vmatprep.subr.mxu0 0.0
    %190 = vmatpush1.msra.mxu0 %v139
    %191 = vmatprep.subr.mxu0 0.0
    %192 = vmatpush1.msra.mxu0 %v138
    %193 = vmatprep.subr.mxu0 0.0
    %194 = vmatpush2.msra.mxu0 0.0
    %195 = vmatprep.subr.mxu0 0.0
    %196 = vmatpush2.msra.mxu0 0.0
    %197 = vmatprep.subr.mxu0 0.0
    %198 = vmatpush2.msra.mxu0 0.0
    %199 = vmatprep.subr.mxu0 0.0
    %200 = vmatpush2.msra.mxu0 0.0
    %201 = vmatprep.subr.mxu0 0.0
    %202 = vmatpush2.msra.mxu0 0.0
    %203 = vmatprep.subr.mxu0 0.0
    %204 = vmatpush2.msra.mxu0 0.0
    %205 = vmatprep.subr.mxu0 0.0
    %206 = vmatpush2.msra.mxu0 0.0
    %207 = vmatprep.subr.mxu0 0.0
    %208 = vmatpush2.msra.mxu0 0.0
    %209 = vmatprep.subr.mxu0 0.0
    %210 = vmatpush2.msra.mxu0 0.0
    %211 = vmatprep.subr.mxu0 0.0
    %212 = vmatpush2.msra.mxu0 0.0
    %213 = vmatprep.subr.mxu0 0.0
    %214 = vmatpush2.msra.mxu0 0.0
    %215 = vmatprep.subr.mxu0 0.0
    %216 = vmatpush2.msra.mxu0 0.0
    %217 = vmatprep.subr.mxu0 0.0
    %218 = vmatpush2.msra.mxu0 0.0
    %219 = vmatprep.subr.mxu0 0.0
    %220 = vmatpush2.msra.mxu0 0.0
    %221 = vmatprep.subr.mxu0 0.0
    %222 = vmatpush2.msra.mxu0 0.0
    %223 = vmatprep.subr.mxu0 0.0
    %224 = vmatpush2.msra.mxu0 0.0
    %225 = vmatprep.mubr.f32.mxu0 0.0
    %226 = vmatmul.mubr.f32.gmra.mxu0 %v137
    %v227 = vpop.f32.mrf.mxu0
    %v228 = vadd.f32 %v159, %v227
    %v229 = vpop.f32.mrf.mxu0
    %230 = vdwg.mxu0
    %v231 = vtanh.pop %v228
    %v232 = vld [vmem:[#allocation4] sm:$0xff]
    %v233 = vld [vmem:[#allocation4 + $0x8] sm:$0xff]
    %v234 = vld [vmem:[#allocation4 + $0x10] sm:$0xff]
    %v235 = vld [vmem:[#allocation4 + $0x18] sm:$0xff]
    %v236 = vld [vmem:[#allocation4 + $0x20] sm:$0xff]
    %v237 = vld [vmem:[#allocation4 + $0x28] sm:$0xff]
    %v238 = vld [vmem:[#allocation4 + $0x30] sm:$0xff]
    %v239 = vld [vmem:[#allocation4 + $0x38] sm:$0xff]
    %v240 = vld [vmem:[#allocation4 + $0x40] sm:$0xff]
    %v241 = vld [vmem:[#allocation4 + $0x48] sm:$0xff]
    %v242 = vld [vmem:[#allocation4 + $0x50] sm:$0xff]
    %v243 = vld [vmem:[#allocation4 + $0x58] sm:$0xff]
    %v244 = vld [vmem:[#allocation4 + $0x60] sm:$0xff]
    %v245 = vld [vmem:[#allocation4 + $0x68] sm:$0xff]
    %v246 = vld [vmem:[#allocation4 + $0x70] sm:$0xff]
    %v247 = vld [vmem:[#allocation4 + $0x78] sm:$0xff]
    %v248 = vld [vmem:[%s6] sm:$0x1]
    %v250 = vlaneseq
    %v251 = vshrl.u32 %v250, 7
    %v252 = vsub.s32 0, %v251
    %v253 = vrot.slane %v248, %v252
    %255 = vmatprep.subr.mxu0 0.0
    %256 = vmatpush1.msra.mxu0 %v247
    %257 = vmatprep.subr.mxu0 0.0
    %258 = vmatpush1.msra.mxu0 %v246
    %259 = vmatprep.subr.mxu0 0.0
    %260 = vmatpush1.msra.mxu0 %v245
    %261 = vmatprep.subr.mxu0 0.0
    %262 = vmatpush1.msra.mxu0 %v244
    %263 = vmatprep.subr.mxu0 0.0
    %264 = vmatpush1.msra.mxu0 %v243
    %265 = vmatprep.subr.mxu0 0.0
    %266 = vmatpush1.msra.mxu0 %v242
    %267 = vmatprep.subr.mxu0 0.0
    %268 = vmatpush1.msra.mxu0 %v241
    %269 = vmatprep.subr.mxu0 0.0
    %270 = vmatpush1.msra.mxu0 %v240
    %271 = vmatprep.subr.mxu0 0.0
    %272 = vmatpush1.msra.mxu0 %v239
    %273 = vmatprep.subr.mxu0 0.0
    %274 = vmatpush1.msra.mxu0 %v238
    %275 = vmatprep.subr.mxu0 0.0
    %276 = vmatpush1.msra.mxu0 %v237
    %277 = vmatprep.subr.mxu0 0.0
    %278 = vmatpush1.msra.mxu0 %v236
    %279 = vmatprep.subr.mxu0 0.0
    %280 = vmatpush1.msra.mxu0 %v235
    %281 = vmatprep.subr.mxu0 0.0
    %282 = vmatpush1.msra.mxu0 %v234
    %283 = vmatprep.subr.mxu0 0.0
    %284 = vmatpush1.msra.mxu0 %v233
    %285 = vmatprep.subr.mxu0 0.0
    %286 = vmatpush1.msra.mxu0 %v232
    %287 = vmatprep.subr.mxu0 0.0
    %288 = vmatpush2.msra.mxu0 0.0
    %289 = vmatprep.subr.mxu0 0.0
    %290 = vmatpush2.msra.mxu0 0.0
    %291 = vmatprep.subr.mxu0 0.0
    %292 = vmatpush2.msra.mxu0 0.0
    %293 = vmatprep.subr.mxu0 0.0
    %294 = vmatpush2.msra.mxu0 0.0
    %295 = vmatprep.subr.mxu0 0.0
    %296 = vmatpush2.msra.mxu0 0.0
    %297 = vmatprep.subr.mxu0 0.0
    %298 = vmatpush2.msra.mxu0 0.0
    %299 = vmatprep.subr.mxu0 0.0
    %300 = vmatpush2.msra.mxu0 0.0
    %301 = vmatprep.subr.mxu0 0.0
    %302 = vmatpush2.msra.mxu0 0.0
    %303 = vmatprep.subr.mxu0 0.0
    %304 = vmatpush2.msra.mxu0 0.0
    %305 = vmatprep.subr.mxu0 0.0
    %306 = vmatpush2.msra.mxu0 0.0
    %307 = vmatprep.subr.mxu0 0.0
    %308 = vmatpush2.msra.mxu0 0.0
    %309 = vmatprep.subr.mxu0 0.0
    %310 = vmatpush2.msra.mxu0 0.0
    %311 = vmatprep.subr.mxu0 0.0
    %312 = vmatpush2.msra.mxu0 0.0
    %313 = vmatprep.subr.mxu0 0.0
    %314 = vmatpush2.msra.mxu0 0.0
    %315 = vmatprep.subr.mxu0 0.0
    %316 = vmatpush2.msra.mxu0 0.0
    %317 = vmatprep.subr.mxu0 0.0
    %318 = vmatpush2.msra.mxu0 0.0
    %319 = vmatprep.mubr.f32.mxu0 0.0
    %320 = vmatmul.mubr.f32.gmra.mxu0 %v231
    %v321 = vpop.f32.mrf.mxu0
    %v322 = vadd.f32 %v253, %v321
    %v323 = vpop.f32.mrf.mxu0
    %324 = vdwg.mxu0
    %325 = vst [vmem:[%s7] sm:$0xff] %v322
    // Predicated region
    $region38: #{policy_forward.1} parent=1 // pred_check
      _
    $region39: #{policy_forward.1} parent=1 // pred_check_branch
      %327 = sbr.rel (0) target = $region41
    $region40: #{policy_forward.1} parent=1 // pred_region
      _
    $region41: #{policy_forward.1} parent=1 // pred_fallthru
      _
    // Predicated region
    $region42: #{policy_forward.1} parent=1 // pred_check
      _
    $region43: #{policy_forward.1} parent=1 // pred_check_branch
      %329 = sbr.rel (0) target = $region45
    $region44: #{policy_forward.1} parent=1 // pred_region
      _
    $region45: #{policy_forward.1} parent=1 // pred_fallthru
      _
    %330 = vsyncpa [#allocation3], 1
    %331 = vsyncpa [#allocation5], 1

</llo_original>
